<compile_context>
chip_gen: v6e
topology: v6e:2x2x1
jax: 0.10.0
libtpu: 0.0.40
codegen_flags: <defaults>
</compile_context>

<pallas_src>
import functools

import jax
import jax.numpy as jnp
from jax import lax
from jax.experimental import pallas as pl
from jax.experimental.pallas import tpu as pltpu

INPUT_FEATURES = 23
OUTPUT_CLASSES = 3

# Batch-tile sizing: ~1088*TB bytes of scoped VMEM (padded + double-buffered).
_MAX_TB = 16384          # ~17.8 MiB — safe on v5e/v6e/v7x with the limit below.
_LANE_CHUNK = 2048       # in-kernel accumulator chunk: (3, 2048) f32 = 16 vregs.
_VMEM_LIMIT_BYTES = 40 << 20  # covers v5e's 16 MiB scoped default; harmless elsewhere.


def _round_up(x, m):
    return ((x + m - 1) // m) * m


def _linear_kernel(x_ref, w_ref, b_ref, o_ref, *, lane_chunk):
    # x_ref: (TB, F), w_ref: (C, F), b_ref: (C, 1), o_ref: (C, TB)
    tb = x_ref.shape[0]
    chunk = tb if tb <= lane_chunk else lane_chunk
    n_chunks = tb // chunk  # TB is constructed as a multiple of lane_chunk when tiled.

    w = w_ref[...]          # (C, F) — hoisted, resident
    b = b_ref[...]          # (C, 1)

    def body(c, carry):
        start = c * chunk
        if chunk % 128 == 0:
            start = pl.multiple_of(start, 128)
        x_chunk = x_ref[pl.ds(start, chunk), :]            # (chunk, F)
        # out^T slice = W @ x_chunk^T: contract the F axis of both operands on the MXU.
        # TODO(synk): on v7x check the lowering for a large relayout of the (TB, F) x
        # tile (rhs contracting on lanes); a features-major x input would avoid it, but
        # the PyTorch contract fixes x as (B, F) and on v5e/v6e it hides under the DMA.
        acc = lax.dot_general(
            w, x_chunk,
            dimension_numbers=(((1,), (1,)), ((), ())),
            preferred_element_type=jnp.float32,
        )
        o_ref[:, pl.ds(start, chunk)] = (acc + b).astype(o_ref.dtype)
        return carry

    lax.fori_loop(0, n_chunks, body, 0, unroll=True)


def softmax_model_forward(x, weight, bias, *, classes_major=False):
    """x: (B, F) f32; weight: (C, F) f32 (PyTorch layout); bias: (C,) f32.

    Returns (B, C) by default (PyTorch forward contract); (C, B) lane-dense result
    without the extra transpose pass if classes_major=True.
    """
    B, F = x.shape
    C = weight.shape[0]
    bias_col = bias.reshape(C, 1)  # column vector, broadcasts over the lane (TB) dim

    if B <= _LANE_CHUNK:
        # Single full block: block shape equals array dims, so no (8,128) constraint.
        TB = B
    else:
        # Multiple of _LANE_CHUNK, capped, and chosen so large batches give >= 2 grid
        # steps (keeps both v7x TensorCores fed when the batch axis is sharded).
        TB = min(_MAX_TB, _round_up(-(-B // 2), _LANE_CHUNK))
    grid = (pl.cdiv(B, TB),)

    kernel = functools.partial(_linear_kernel, lane_chunk=_LANE_CHUNK)

    out_t = pl.pallas_call(
        kernel,
        out_shape=jax.ShapeDtypeStruct((C, B), x.dtype),
        grid_spec=pltpu.PrefetchScalarGridSpec(
            num_scalar_prefetch=0,
            grid=grid,
            in_specs=[
                pl.BlockSpec((TB, F), lambda i: (i, 0)),   # streaming x tile
                pl.BlockSpec((C, F), lambda i: (0, 0)),    # resident weight
                pl.BlockSpec((C, 1), lambda i: (0, 0)),    # resident bias
            ],
            out_specs=pl.BlockSpec((C, TB), lambda i: (0, i)),  # lane-dense out^T
        ),
        compiler_params=pltpu.CompilerParams(
            # With grid >= 2 the batch tiles shard across v7x's two TensorCores; swap
            # to pltpu.CORE_PARALLEL if plain "parallel" does not split the grid there.
            dimension_semantics=("parallel",),
            vmem_limit_bytes=_VMEM_LIMIT_BYTES,
        ),
        cost_estimate=pl.CostEstimate(
            flops=2 * B * F * C,
            transcendentals=0,
            bytes_accessed=4 * (B * F + C * F + C + B * C),
        ),
    )(x, weight, bias_col)

    if classes_major:
        return out_t          # (C, B), no extra HBM pass
    return out_t.T            # (B, C) — tiny wrapper-side transpose for PyTorch parity


def _ref_forward(x, weight, bias):
    return x @ weight.T + bias


if __name__ == "__main__":
    key = jax.random.PRNGKey(0)
    k_x, k_w, k_b, k_x2 = jax.random.split(key, 4)

    # Deterministic parameter init mimicking nn.Linear's uniform(-1/sqrt(F), 1/sqrt(F)).
    bound = 1.0 / (INPUT_FEATURES ** 0.5)
    weight = jax.random.uniform(
        k_w, (OUTPUT_CLASSES, INPUT_FEATURES), dtype=jnp.float32,
        minval=-bound, maxval=bound)
    bias = jax.random.uniform(
        k_b, (OUTPUT_CLASSES,), dtype=jnp.float32, minval=-bound, maxval=bound)

    # Small batch: single full block, grid=(1,).
    batch = 8
    x = jax.random.normal(k_x, (batch, INPUT_FEATURES), dtype=jnp.float32)
    out = jax.block_until_ready(softmax_model_forward(x, weight, bias))
    ref = _ref_forward(x, weight, bias)
    assert out.shape == (batch, OUTPUT_CLASSES), out.shape
    assert jnp.allclose(out, ref, atol=1e-5, rtol=1e-5), "mismatch vs reference (B=8)"

    # Large batch: exercises full-size TB tiles, the chunked inner loop, the raised
    # VMEM limit, and a partial trailing tile (masked writeback).
    batch2 = 2 * _MAX_TB + 160
    x2 = jax.random.normal(k_x2, (batch2, INPUT_FEATURES), dtype=jnp.float32)
    out2 = jax.block_until_ready(softmax_model_forward(x2, weight, bias))
    ref2 = _ref_forward(x2, weight, bias)
    assert out2.shape == (batch2, OUTPUT_CLASSES), out2.shape
    assert jnp.allclose(out2, ref2, atol=1e-5, rtol=1e-5), "mismatch vs reference (tiled)"

    print("KERNEL_OK")
</pallas_src>

<mosaic_0001>
module attributes {stable_mosaic.version = 11 : i64} {
  func.func @_linear_kernel(%arg0: i32, %arg1: memref<8x23xf32, #tpu.memory_space<vmem>>, %arg2: memref<3x23xf32, #tpu.memory_space<vmem>>, %arg3: memref<3x1xf32, #tpu.memory_space<vmem>>, %arg4: memref<3x8xf32, #tpu.memory_space<vmem>>) attributes {dimension_semantics = [#tpu.dimension_semantics<parallel>], iteration_bounds = array<i64: 1>, scalar_prefetch = 0 : i64, scratch_operands = 0 : i64, tpu.core_type = #tpu.core_type<tc>, window_params = [{transform_indices = @transform_0, window_bounds = array<i64: 8, 23>}, {pipeline_mode = #tpu.pipeline_mode<synchronous>, transform_indices = @transform_1, window_bounds = array<i64: 3, 23>}, {pipeline_mode = #tpu.pipeline_mode<synchronous>, transform_indices = @transform_2, window_bounds = array<i64: 3, 1>}, {transform_indices = @transform_3, window_bounds = array<i64: 3, 8>}]} {
    %c0 = arith.constant 0 : index
    %c0_0 = arith.constant 0 : index
    %0 = vector.load %arg2[%c0, %c0_0] : memref<3x23xf32, #tpu.memory_space<vmem>>, vector<3x23xf32>
    %c0_1 = arith.constant 0 : index
    %c0_2 = arith.constant 0 : index
    %1 = vector.load %arg3[%c0_1, %c0_2] : memref<3x1xf32, #tpu.memory_space<vmem>>, vector<3x1xf32>
    %c0_i32 = arith.constant 0 : i32
    %c8_i32 = arith.constant 8 : i32
    %2 = arith.muli %c0_i32, %c8_i32 : i32
    %3 = arith.index_cast %2 : i32 to index
    %c0_3 = arith.constant 0 : index
    %4 = vector.load %arg1[%3, %c0_3] : memref<8x23xf32, #tpu.memory_space<vmem>>, vector<8x23xf32>
    %cst = arith.constant dense<0.000000e+00> : vector<3x8xf32>
    %5 = tpu.matmul %0, %4, %cst {dimension_numbers = #tpu.dot_dimension_numbers<[1], [1], [0], [0], [0, 0, 1, 0], [], []>} : vector<3x23xf32>, vector<8x23xf32>, vector<3x8xf32> -> vector<3x8xf32>
    %6 = vector.broadcast %1 : vector<3x1xf32> to vector<3x8xf32>
    %7 = arith.addf %5, %6 : vector<3x8xf32>
    %c0_4 = arith.constant 0 : index
    %8 = arith.index_cast %2 : i32 to index
    %9 = vector.load %arg4[%c0_4, %8] : memref<3x8xf32, #tpu.memory_space<vmem>>, vector<3x8xf32>
    tpu.vector_store %arg4[%c0_4, %8], %7 {strides = array<i32>} : memref<3x8xf32, #tpu.memory_space<vmem>>, vector<3x8xf32>,
    %c1_i32 = arith.constant 1 : i32
    return
  }
  func.func @transform_0(%arg0: i32) -> (i32, i32) {
    %c0_i32 = arith.constant 0 : i32
    %c0_i32_0 = arith.constant 0 : i32
    return %arg0, %c0_i32 : i32, i32
  }
  func.func @transform_1(%arg0: i32) -> (i32, i32) {
    %c0_i32 = arith.constant 0 : i32
    %c0_i32_0 = arith.constant 0 : i32
    %c0_i32_1 = arith.constant 0 : i32
    return %c0_i32, %c0_i32_0 : i32, i32
  }
  func.func @transform_2(%arg0: i32) -> (i32, i32) {
    %c0_i32 = arith.constant 0 : i32
    %c0_i32_0 = arith.constant 0 : i32
    %c0_i32_1 = arith.constant 0 : i32
    return %c0_i32, %c0_i32_0 : i32, i32
  }
  func.func @transform_3(%arg0: i32) -> (i32, i32) {
    %c0_i32 = arith.constant 0 : i32
    %c0_i32_0 = arith.constant 0 : i32
    return %c0_i32, %arg0 : i32, i32
  }
}

</mosaic_0001>

<llo_original>
// kernel: tpu_custom_call.1
$region0: #{tpu_custom_call.1}
  #allocation0 [shape = 'u32[]', space=smem, size = 0x4, offset = 0x4, fixed_abs, tag = 'smem constant byte address 0x4 - core index']
  #allocation1 [shape = 'u32[144,128]{1,0:T(1,128)}', space=vmem, size = 0x12000, scoped, tag = 'internal scratch']
  %s0 = inlined_call_operand.hbm [shape: f32[8,23], index: 0, kind: input, shape index: {}]
  %s1 = inlined_call_operand.vmem [shape: f32[3,23], index: 1, kind: input, shape index: {}]
  %s2 = inlined_call_operand.vmem [shape: f32[3,1], index: 2, kind: input, shape index: {}]
  %s3 = inlined_call_operand.hbm [shape: f32[3,8], index: 3, kind: output, shape index: {}]
  %s4 = sld [smem:[#allocation0]]
  $region26: #{tpu_custom_call.1} parent=0
    _
  %s6 = ssub.s32 1, %s4
  %s7 = scalar_select 0, %s6, %s4
  $region1: #{tpu_custom_call.1} parent=0
    #allocation2 [shape = 'u8[4096]{0}', space=vmem, size = 0x1000, scoped, tag = 'input window, operand 0, single buffered']
    #allocation3 [shape = 's32[1]{0}', space=sflag, size = 0x4, scoped, tag = 'scoped memory for tpu_custom_call.1']
    #allocation4 [shape = 's32[1]{0}', space=sflag, size = 0x4, scoped, tag = 'scoped memory for tpu_custom_call.1']
    #allocation5 [shape = 'u8[2048]{0}', space=vmem, size = 0x800, scoped, tag = 'output window, operand 0, single buffered']
    %8 = vsyncpa [#allocation3], 0
    %9 = vsyncpa [#allocation4], 0
    // Predicated region
    $region2: #{tpu_custom_call.1} parent=1 // pred_check
      _
    $region3: #{tpu_custom_call.1} parent=1 // pred_check_branch
      %11 = sbr.rel (0) target = $region5
    $region4: #{tpu_custom_call.1} parent=1 // pred_region
      %s13 = ssub.s32 128, 128
      %14 = vsyncadd [#allocation3], %s13
      %s16 = sshll.u32 [#allocation2], 4
      %s17 = int_to_ptr.vmem [resolvable:$true] %s16
      %19 = dma.hbm_to_vmem [thread:$0]  %s0, 128, %s17, [#allocation3]
    $region5: #{tpu_custom_call.1} parent=1 // pred_fallthru
      _
    // Predicated region
    $region6: #{tpu_custom_call.1} parent=1 // pred_check
      _
    $region7: #{tpu_custom_call.1} parent=1 // pred_check_branch
      %21 = sbr.rel (0) target = $region9
    $region8: #{tpu_custom_call.1} parent=1 // pred_region
      _
    $region9: #{tpu_custom_call.1} parent=1 // pred_fallthru
      _
    // Predicated region
    $region10: #{tpu_custom_call.1} parent=1 // pred_check
      _
    $region11: #{tpu_custom_call.1} parent=1 // pred_check_branch
      %23 = sbr.rel (0) target = $region13
    $region12: #{tpu_custom_call.1} parent=1 // pred_region
      _
    $region13: #{tpu_custom_call.1} parent=1 // pred_fallthru
      _
    // Predicated region
    $region14: #{tpu_custom_call.1} parent=1 // pred_check
      _
    $region15: #{tpu_custom_call.1} parent=1 // pred_check_branch
      %25 = sbr.rel (0) target = $region17
    $region16: #{tpu_custom_call.1} parent=1 // pred_region
      %26 = dma.done [#allocation3], 128
    $region17: #{tpu_custom_call.1} parent=1 // pred_fallthru
      _
    %v27 = vld [vmem:[%s1] sm:$0x7]
    %v28 = vld [vmem:[%s2] sm:$0x7]
    %v29 = vld [vmem:[#allocation2] sm:$0xff]
    %31 = vset.pattern.permute.xlu0 0
    %32 = vperm.xlu0 %31, %v28
    %v33 = vpop.permute.xlu0 %32
    %vm35 = vcmask 187392
    %v37 = vsel %vm35, %v27, 0
    %v40 = vsel %vm35, %v29, 0
    %42 = vmatprep.subr.mxu0 0.0
    %43 = vmatpush1.xpose.msra.mxu0 0.0
    %44 = vmatprep.subr.mxu0 0.0
    %45 = vmatpush1.xpose.msra.mxu0 0.0
    %46 = vmatprep.subr.mxu0 0.0
    %47 = vmatpush1.xpose.msra.mxu0 0.0
    %48 = vmatprep.subr.mxu0 0.0
    %49 = vmatpush1.xpose.msra.mxu0 0.0
    %50 = vmatprep.subr.mxu0 0.0
    %51 = vmatpush1.xpose.msra.mxu0 0.0
    %52 = vmatprep.subr.mxu0 0.0
    %53 = vmatpush1.xpose.msra.mxu0 0.0
    %54 = vmatprep.subr.mxu0 0.0
    %55 = vmatpush1.xpose.msra.mxu0 0.0
    %56 = vmatprep.subr.mxu0 0.0
    %57 = vmatpush1.xpose.msra.mxu0 0.0
    %58 = vmatprep.subr.mxu0 0.0
    %59 = vmatpush1.xpose.msra.mxu0 0.0
    %60 = vmatprep.subr.mxu0 0.0
    %61 = vmatpush1.xpose.msra.mxu0 0.0
    %62 = vmatprep.subr.mxu0 0.0
    %63 = vmatpush1.xpose.msra.mxu0 0.0
    %64 = vmatprep.subr.mxu0 0.0
    %65 = vmatpush1.xpose.msra.mxu0 0.0
    %66 = vmatprep.subr.mxu0 0.0
    %67 = vmatpush1.xpose.msra.mxu0 0.0
    %68 = vmatprep.subr.mxu0 0.0
    %69 = vmatpush1.xpose.msra.mxu0 0.0
    %70 = vmatprep.subr.mxu0 0.0
    %71 = vmatpush1.xpose.msra.mxu0 0.0
    %72 = vmatprep.subr.mxu0 0.0
    %73 = vmatpush1.xpose.msra.mxu0 %v40
    %74 = vmatprep.subr.mxu0 0.0
    %75 = vmatpush2.xpose.msra.mxu0 0.0
    %76 = vmatprep.subr.mxu0 0.0
    %77 = vmatpush2.xpose.msra.mxu0 0.0
    %78 = vmatprep.subr.mxu0 0.0
    %79 = vmatpush2.xpose.msra.mxu0 0.0
    %80 = vmatprep.subr.mxu0 0.0
    %81 = vmatpush2.xpose.msra.mxu0 0.0
    %82 = vmatprep.subr.mxu0 0.0
    %83 = vmatpush2.xpose.msra.mxu0 0.0
    %84 = vmatprep.subr.mxu0 0.0
    %85 = vmatpush2.xpose.msra.mxu0 0.0
    %86 = vmatprep.subr.mxu0 0.0
    %87 = vmatpush2.xpose.msra.mxu0 0.0
    %88 = vmatprep.subr.mxu0 0.0
    %89 = vmatpush2.xpose.msra.mxu0 0.0
    %90 = vmatprep.subr.mxu0 0.0
    %91 = vmatpush2.xpose.msra.mxu0 0.0
    %92 = vmatprep.subr.mxu0 0.0
    %93 = vmatpush2.xpose.msra.mxu0 0.0
    %94 = vmatprep.subr.mxu0 0.0
    %95 = vmatpush2.xpose.msra.mxu0 0.0
    %96 = vmatprep.subr.mxu0 0.0
    %97 = vmatpush2.xpose.msra.mxu0 0.0
    %98 = vmatprep.subr.mxu0 0.0
    %99 = vmatpush2.xpose.msra.mxu0 0.0
    %100 = vmatprep.subr.mxu0 0.0
    %101 = vmatpush2.xpose.msra.mxu0 0.0
    %102 = vmatprep.subr.mxu0 0.0
    %103 = vmatpush2.xpose.msra.mxu0 0.0
    %104 = vmatprep.subr.mxu0 0.0
    %105 = vmatpush2.xpose.msra.mxu0 0.0
    %106 = vmatprep.mubr.f32.mxu0 0.0
    %107 = vmatmul.mubr.f32.gmra.mxu0 %v37
    %v108 = vpop.f32.mrf.mxu0
    %v109 = vadd.f32 %v33, %v108
    %v110 = vpop.f32.mrf.mxu0
    %111 = vdwg.mxu0
    %vm112 = vcmask 59392
    %113 = vst.msk [vmem:[#allocation5] sm:$0x7] %vm112, %v109
    // Predicated region
    $region18: #{tpu_custom_call.1} parent=1 // pred_check
      _
    $region19: #{tpu_custom_call.1} parent=1 // pred_check_branch
      %115 = sbr.rel (0) target = $region21
    $region20: #{tpu_custom_call.1} parent=1 // pred_region
      %s117 = ssub.s32 64, 64
      %118 = vsyncadd [#allocation4], %s117
      %s120 = sshll.u32 [#allocation5], 4
      %s121 = int_to_ptr.vmem [resolvable:$true] %s120
      %123 = dma.vmem_to_hbm [thread:$0]  %s121, 64, %s3, [#allocation4]
    $region21: #{tpu_custom_call.1} parent=1 // pred_fallthru
      _
    // Predicated region
    $region22: #{tpu_custom_call.1} parent=1 // pred_check
      _
    $region23: #{tpu_custom_call.1} parent=1 // pred_check_branch
      %125 = sbr.rel (0) target = $region25
    $region24: #{tpu_custom_call.1} parent=1 // pred_region
      %126 = dma.done [#allocation4], 64
    $region25: #{tpu_custom_call.1} parent=1 // pred_fallthru
      _
    %127 = vsyncpa [#allocation3], 1
    %128 = vsyncpa [#allocation4], 1

</llo_original>
